<compile_context>
chip_gen: v6e
topology: v6e:2x2x1
jax: 0.10.0
libtpu: 0.0.40
codegen_flags: <defaults>
</compile_context>

<pallas_src>
import jax
import jax.numpy as jnp
from jax.experimental import pallas as pl
from jax.experimental.pallas import tpu as pltpu


def _ce2d_kernel(logits_ref, tgt_ref, out_ref):
    # logits_ref: (C, TILE_HW) float    tgt_ref: (1, TILE_HW) int32
    # out_ref:    (8, 128) float32 per-tile partials (row 0: NLL sum, row 1: valid count)
    x = logits_ref[...].astype(jnp.float32)                    # (C, T)
    tgt = tgt_ref[...]                                         # (1, T)
    c = x.shape[0]

    # Numerically stable log-softmax pieces over the class (sublane) axis.
    m = jnp.max(x, axis=0, keepdims=True)                      # (1, T)   XLU reduce
    shifted = x - m                                            # (C, T)   VPU
    lse = jnp.log(jnp.sum(jnp.exp(shifted), axis=0, keepdims=True))   # (1, T)  EUP + XLU

    # One-hot gather of shifted[target]; NLL per pixel = lse - shifted[target].
    class_ids = jax.lax.broadcasted_iota(jnp.int32, x.shape, 0)       # (C, T)
    picked = jnp.sum(jnp.where(class_ids == tgt, shifted, 0.0),
                     axis=0, keepdims=True)                           # (1, T)

    valid = jnp.logical_and(tgt >= 0, tgt < c)                 # ignore_index pixels drop out
    nll = jnp.where(valid, lse - picked, 0.0)                  # (1, T)

    nll_sum = jnp.sum(nll)                                     # scalar partial for this tile
    n_valid = jnp.sum(valid.astype(jnp.float32))               # scalar valid-pixel count

    # Fill the (8, 128) output block: row 0 <- nll_sum, row 1 <- n_valid, rest zero.
    row = jax.lax.broadcasted_iota(jnp.int32, out_ref.shape, 0)
    out_ref[...] = jnp.where(row == 0, nll_sum,
                             jnp.where(row == 1, n_valid, 0.0)).astype(jnp.float32)


def _choose_tile_hw(hw, c, max_block_bytes):
    """Largest TILE_HW that divides hw, is a multiple of 128 (or equals hw), and keeps
    the logits block (c * TILE_HW * 4 bytes, in f32) under max_block_bytes."""
    max_t = max(128, max_block_bytes // (c * 4))
    if hw <= max_t:
        return hw                      # one block per batch row; full-dim block is legal
    t = (max_t // 128) * 128
    while t >= 128:
        if hw % t == 0:
            return t
        t -= 128
    return hw  # fallback: one block per batch row (correct, may exceed the byte budget)


def cross_entropy_loss_2d(logits_nchw, targets_nhw, *, max_block_bytes=2 * 1024 * 1024):
    """Equivalent of CrossEntropyLoss2d()(inputs, targets): mean NLL of log_softmax over
    the class axis (weight=None, size_average=True, ignore_index=-100 pixels excluded)."""
    n, c, h, w = logits_nchw.shape
    hw = h * w

    logits = logits_nchw.reshape(n, c, hw)                 # free reshape of native NCHW
    targets = targets_nhw.reshape(n, 1, hw).astype(jnp.int32)

    tile_hw = _choose_tile_hw(hw, c, max_block_bytes)
    num_tiles = hw // tile_hw
    grid = (n, num_tiles)

    partials = pl.pallas_call(
        _ce2d_kernel,
        out_shape=jax.ShapeDtypeStruct((n * 8, num_tiles * 128), jnp.float32),
        grid_spec=pltpu.PrefetchScalarGridSpec(
            num_scalar_prefetch=0,
            grid=grid,
            in_specs=[
                pl.BlockSpec((pl.Squeezed(), c, tile_hw), lambda i, t: (i, 0, t)),
                pl.BlockSpec((pl.Squeezed(), 1, tile_hw), lambda i, t: (i, 0, t)),
            ],
            out_specs=pl.BlockSpec((8, 128), lambda i, t: (i, t)),
        ),
        compiler_params=pltpu.CompilerParams(
            dimension_semantics=("parallel", "parallel"),
        ),
    )(logits, targets)

    # Block (i, t) lives at rows [8i, 8i+8), cols [128t, 128t+128): reshape to pick the
    # two partial rows (lane 0 carries the scalar) and tree-sum on the host side of XLA.
    p = partials.reshape(n, 8, num_tiles, 128)
    nll_sum = jnp.sum(p[:, 0, :, 0])               # (n, num_tiles) partial NLL sums
    n_valid = jnp.sum(p[:, 1, :, 0])               # (n, num_tiles) valid-pixel counts
    return nll_sum / n_valid


def _reference(logits_nchw, targets_nhw):
    # Pure-JAX reference for a correctness sanity check (all targets valid here).
    logp = jax.nn.log_softmax(logits_nchw.astype(jnp.float32), axis=1)   # (N,C,H,W)
    gathered = jnp.take_along_axis(
        logp, targets_nhw[:, None, :, :].astype(jnp.int32), axis=1
    )[:, 0]                                                              # (N,H,W)
    return -jnp.mean(gathered)


if __name__ == "__main__":
    key = jax.random.PRNGKey(0)
    k1, k2 = jax.random.split(key)

    N, C, H, W = 2, 4, 16, 16
    logits = jax.random.normal(k1, (N, C, H, W), dtype=jnp.float32)
    targets = jax.random.randint(k2, (N, H, W), 0, C, dtype=jnp.int32)

    loss = cross_entropy_loss_2d(logits, targets)
    loss = jax.block_until_ready(loss)

    ref = jax.block_until_ready(_reference(logits, targets))
    assert jnp.allclose(loss, ref, rtol=1e-5, atol=1e-5), (loss, ref)

    print("KERNEL_OK")
</pallas_src>

<mosaic_0001>
module attributes {stable_mosaic.version = 11 : i64} {
  func.func @_ce2d_kernel(%arg0: i32, %arg1: i32, %arg2: memref<1x4x256xf32, #tpu.memory_space<vmem>>, %arg3: memref<1x1x256xi32, #tpu.memory_space<vmem>>, %arg4: memref<8x128xf32, #tpu.memory_space<vmem>>) attributes {dimension_semantics = [#tpu.dimension_semantics<parallel>, #tpu.dimension_semantics<parallel>], iteration_bounds = array<i64: 2, 1>, scalar_prefetch = 0 : i64, scratch_operands = 0 : i64, tpu.core_type = #tpu.core_type<tc>, window_params = [{transform_indices = @transform_0, window_bounds = array<i64: 1, 4, 256>}, {transform_indices = @transform_1, window_bounds = array<i64: 1, 1, 256>}, {transform_indices = @transform_2, window_bounds = array<i64: 8, 128>}]} {
    %c0 = arith.constant 0 : index
    %c0_0 = arith.constant 0 : index
    %c0_1 = arith.constant 0 : index
    %0 = vector.load %arg2[%c0, %c0_0, %c0_1] : memref<1x4x256xf32, #tpu.memory_space<vmem>>, vector<1x4x256xf32>
    %1 = vector.shape_cast %0 : vector<1x4x256xf32> to vector<4x256xf32>
    %c0_2 = arith.constant 0 : index
    %c0_3 = arith.constant 0 : index
    %c0_4 = arith.constant 0 : index
    %2 = vector.load %arg3[%c0_2, %c0_3, %c0_4] : memref<1x1x256xi32, #tpu.memory_space<vmem>>, vector<1x1x256xi32>
    %3 = vector.shape_cast %2 : vector<1x1x256xi32> to vector<1x256xi32>
    %cst = arith.constant dense<0xFF800000> : vector<256xf32>
    %4 = vector.multi_reduction <maximumf>, %1, %cst [0] : vector<4x256xf32> to vector<256xf32>
    %5 = vector.shape_cast %4 : vector<256xf32> to vector<1x256xf32>
    %6 = vector.broadcast %5 : vector<1x256xf32> to vector<4x256xf32>
    %7 = arith.subf %1, %6 : vector<4x256xf32>
    %8 = math.exp %7 : vector<4x256xf32>
    %cst_5 = arith.constant dense<0.000000e+00> : vector<256xf32>
    %9 = vector.multi_reduction <add>, %8, %cst_5 [0] : vector<4x256xf32> to vector<256xf32>
    %10 = vector.shape_cast %9 : vector<256xf32> to vector<1x256xf32>
    %11 = math.log %10 : vector<1x256xf32>
    %12 = tpu.iota {dimensions = array<i32: 0>} : vector<4x256xi32>
    %13 = vector.broadcast %3 : vector<1x256xi32> to vector<4x256xi32>
    %14 = arith.cmpi eq, %12, %13 : vector<4x256xi32>
    %cst_6 = arith.constant 0.000000e+00 : f32
    %15 = vector.broadcast %cst_6 : f32 to vector<4x256xf32>
    %16 = arith.select %14, %7, %15 : vector<4x256xi1>, vector<4x256xf32>
    %cst_7 = arith.constant dense<0.000000e+00> : vector<256xf32>
    %17 = vector.multi_reduction <add>, %16, %cst_7 [0] : vector<4x256xf32> to vector<256xf32>
    %18 = vector.shape_cast %17 : vector<256xf32> to vector<1x256xf32>
    %c0_i32 = arith.constant 0 : i32
    %19 = vector.broadcast %c0_i32 : i32 to vector<1x256xi32>
    %20 = arith.cmpi sge, %3, %19 : vector<1x256xi32>
    %c4_i32 = arith.constant 4 : i32
    %21 = vector.broadcast %c4_i32 : i32 to vector<1x256xi32>
    %22 = arith.cmpi slt, %3, %21 : vector<1x256xi32>
    %23 = arith.andi %20, %22 : vector<1x256xi1>
    %24 = arith.subf %11, %18 : vector<1x256xf32>
    %cst_8 = arith.constant 0.000000e+00 : f32
    %25 = vector.broadcast %cst_8 : f32 to vector<1x256xf32>
    %26 = arith.select %23, %24, %25 : vector<1x256xi1>, vector<1x256xf32>
    %27 = vector.shape_cast %26 : vector<1x256xf32> to vector<1x1x256xf32>
    %cst_9 = arith.constant dense<0.000000e+00> : vector<1xf32>
    %28 = vector.multi_reduction <add>, %27, %cst_9 [1, 2] : vector<1x1x256xf32> to vector<1xf32>
    %29 = vector.shape_cast %28 : vector<1xf32> to vector<1x1x1xf32>
    %30 = vector.extract %29[0, 0, 0] : f32 from vector<1x1x1xf32>
    %31 = arith.extui %23 : vector<1x256xi1> to vector<1x256xi32>
    %32 = arith.sitofp %31 : vector<1x256xi32> to vector<1x256xf32>
    %33 = vector.shape_cast %32 : vector<1x256xf32> to vector<1x1x256xf32>
    %cst_10 = arith.constant dense<0.000000e+00> : vector<1xf32>
    %34 = vector.multi_reduction <add>, %33, %cst_10 [1, 2] : vector<1x1x256xf32> to vector<1xf32>
    %35 = vector.shape_cast %34 : vector<1xf32> to vector<1x1x1xf32>
    %36 = vector.extract %35[0, 0, 0] : f32 from vector<1x1x1xf32>
    %37 = tpu.iota {dimensions = array<i32: 0>} : vector<8x128xi32>
    %c0_i32_11 = arith.constant 0 : i32
    %38 = vector.broadcast %c0_i32_11 : i32 to vector<8x128xi32>
    %39 = arith.cmpi eq, %37, %38 : vector<8x128xi32>
    %c1_i32 = arith.constant 1 : i32
    %40 = vector.broadcast %c1_i32 : i32 to vector<8x128xi32>
    %41 = arith.cmpi eq, %37, %40 : vector<8x128xi32>
    %cst_12 = arith.constant 0.000000e+00 : f32
    %42 = vector.broadcast %36 : f32 to vector<8x128xf32>
    %43 = vector.broadcast %cst_12 : f32 to vector<8x128xf32>
    %44 = arith.select %41, %42, %43 : vector<8x128xi1>, vector<8x128xf32>
    %45 = vector.broadcast %30 : f32 to vector<8x128xf32>
    %46 = arith.select %39, %45, %44 : vector<8x128xi1>, vector<8x128xf32>
    %c0_13 = arith.constant 0 : index
    %c0_14 = arith.constant 0 : index
    %47 = vector.load %arg4[%c0_13, %c0_14] : memref<8x128xf32, #tpu.memory_space<vmem>>, vector<8x128xf32>
    tpu.vector_store %arg4[%c0_13, %c0_14], %46 {strides = array<i32>} : memref<8x128xf32, #tpu.memory_space<vmem>>, vector<8x128xf32>,
    return
  }
  func.func @transform_0(%arg0: i32, %arg1: i32) -> (i32, i32, i32) {
    %c0_i32 = arith.constant 0 : i32
    %c0_i32_0 = arith.constant 0 : i32
    return %arg0, %c0_i32, %arg1 : i32, i32, i32
  }
  func.func @transform_1(%arg0: i32, %arg1: i32) -> (i32, i32, i32) {
    %c0_i32 = arith.constant 0 : i32
    %c0_i32_0 = arith.constant 0 : i32
    return %arg0, %c0_i32, %arg1 : i32, i32, i32
  }
  func.func @transform_2(%arg0: i32, %arg1: i32) -> (i32, i32) {
    %c0_i32 = arith.constant 0 : i32
    return %arg0, %arg1 : i32, i32
  }
}

</mosaic_0001>

<llo_original>
// kernel: tpu_custom_call.1
$region0: #{tpu_custom_call.1}
  #allocation0 [shape = 'u32[]', space=smem, size = 0x4, offset = 0x4, fixed_abs, tag = 'smem constant byte address 0x4 - core index']
  #allocation1 [shape = 'u32[144,128]{1,0:T(1,128)}', space=vmem, size = 0x12000, scoped, tag = 'internal scratch']
  %s0 = inlined_call_operand.hbm [shape: f32[2,4,256], index: 0, kind: input, shape index: {}]
  %s1 = inlined_call_operand.hbm [shape: s32[2,1,256], index: 1, kind: input, shape index: {}]
  %s2 = inlined_call_operand.hbm [shape: f32[16,128], index: 2, kind: output, shape index: {}]
  %s3 = sld [smem:[#allocation0]]
  $region49: #{tpu_custom_call.1} parent=0
    _
  %s5 = ssub.s32 1, %s3
  %s6 = scalar_select 0, %s5, %s3
  $region1: #{tpu_custom_call.1} parent=0
    #allocation2 [shape = 'u8[8192]{0}', space=vmem, size = 0x2000, scoped, tag = 'input window, operand 0']
    #allocation3 [shape = 's32[2]{0}', space=sflag, size = 0x8, scoped, tag = 'scoped memory for tpu_custom_call.1']
    #allocation4 [shape = 's32[2]{0}', space=sflag, size = 0x8, scoped, tag = 'scoped memory for tpu_custom_call.1']
    #allocation5 [shape = 'u8[2048]{0}', space=vmem, size = 0x800, scoped, tag = 'input window, operand 1']
    #allocation6 [shape = 's32[2]{0}', space=sflag, size = 0x8, scoped, tag = 'scoped memory for tpu_custom_call.1']
    #allocation7 [shape = 'u8[8192]{0}', space=vmem, size = 0x2000, scoped, tag = 'output window, operand 0']
    %7 = vsyncpa [#allocation3], 0
    %s8 = scalar_lea.sflag [#allocation3], 1
    %9 = vsyncpa %s8, 0
    %10 = vsyncpa [#allocation6], 0
    %s11 = scalar_lea.sflag [#allocation6], 1
    %12 = vsyncpa %s11, 0
    %13 = vsyncpa [#allocation4], 0
    %s14 = scalar_lea.sflag [#allocation4], 1
    %15 = vsyncpa %s14, 0
    loop: start=0, step=1, limit=4
    $region2: #{tpu_custom_call.1} parent=1 // loop_pre_header
      _
    $region3: #{tpu_custom_call.1} parent=1 // loop_header
      %s17 = sphi 0, %s21
      %p18 = scmp.ge.s32.totalorder %s17, 4
      %s24 = sphi 0, %s36
      %s25 = sphi 0, %s32
      %s26 = sphi 0, %s24
      %s27 = sphi 0, %s25
      %s28 = sphi 0, %s26
      %s29 = sphi 0, %s27
      %s41 = sphi 0, %s43
      %s44 = sphi 0, %s41
      %s45 = sphi 0, %s44
      %s61 = sphi 0, %s45
      %s69 = sphi 0, %s71
      %s72 = sphi 0, %s69
      %s73 = sphi 0, %s72
      %s89 = sphi 0, %s73
      %s97 = sphi 0, %s99
      %s100 = sphi 0, %s97
      %s101 = sphi 0, %s100
      %s117 = sphi 0, %s101
    $region4: #{tpu_custom_call.1} parent=1 // loop_header_branch
      %20 = sbr.rel (%p18) target = $region8
    $region5: #{tpu_custom_call.1} parent=1 // loop_body
      %s22 = ssub.s32 %s17, 1
      %s23 = ssub.s32 %s17, 2
      %s30 = sadd.s32 1, %s25
      %p31 = scmp.ge.s32.totalorder %s30, 1
      %s32 = scalar_select %p31, 0, %s30
      %s33 = sadd.s32 1, %s24
      %s34 = scalar_select %p31, %s33, %s24
      %p35 = scmp.ge.s32.totalorder %s34, 2
      %s36 = scalar_select %p35, 0, %s34
      %s37 = ssub.s32 %s24, %s36
      %s38 = ssub.s32 %s25, %s32
      %s39 = sor.u32 %s37, %s38
      %p40 = scmp.eq.s32.totalorder %s39, 0
      %s42 = sadd.s32 %s41, 1
      %s43 = scalar_select %p40, %s41, %s42
      %p46 = pneg %p40
      %p47 = scmp.eq.s32.totalorder %s17, 1
      %p48 = por %p46, %p47
      %p49 = scmp.ne.s32.totalorder %s41, %s44
      %p50 = scmp.eq.s32.totalorder %s17, 0
      %p51 = por %p49, %p50
      %p52 = scmp.ne.s32.totalorder %s41, %s44
      %p53 = scmp.eq.s32.totalorder %s22, 1
      %p54 = por %p52, %p53
      %p55 = scmp.ne.s32.totalorder %s44, %s45
      %p56 = scmp.eq.s32.totalorder %s22, 0
      %p57 = por %p55, %p56
      %p58 = scmp.ne.s32.totalorder %s44, %s45
      %p59 = scmp.eq.s32.totalorder %s23, 1
      %p60 = por %p58, %p59
      %p62 = scmp.ne.s32.totalorder %s45, %s61
      %p63 = scmp.eq.s32.totalorder %s23, 0
      %p64 = por %p62, %p63
      %s65 = ssub.s32 %s24, %s36
      %s66 = ssub.s32 %s25, %s32
      %s67 = sor.u32 %s65, %s66
      %p68 = scmp.eq.s32.totalorder %s67, 0
      %s70 = sadd.s32 %s69, 1
      %s71 = scalar_select %p68, %s69, %s70
      %p74 = pneg %p68
      %p75 = scmp.eq.s32.totalorder %s17, 1
      %p76 = por %p74, %p75
      %p77 = scmp.ne.s32.totalorder %s69, %s72
      %p78 = scmp.eq.s32.totalorder %s17, 0
      %p79 = por %p77, %p78
      %p80 = scmp.ne.s32.totalorder %s69, %s72
      %p81 = scmp.eq.s32.totalorder %s22, 1
      %p82 = por %p80, %p81
      %p83 = scmp.ne.s32.totalorder %s72, %s73
      %p84 = scmp.eq.s32.totalorder %s22, 0
      %p85 = por %p83, %p84
      %p86 = scmp.ne.s32.totalorder %s72, %s73
      %p87 = scmp.eq.s32.totalorder %s23, 1
      %p88 = por %p86, %p87
      %p90 = scmp.ne.s32.totalorder %s73, %s89
      %p91 = scmp.eq.s32.totalorder %s23, 0
      %p92 = por %p90, %p91
      %s93 = ssub.s32 %s24, %s36
      %s94 = ssub.s32 %s25, %s32
      %s95 = sor.u32 %s93, %s94
      %p96 = scmp.eq.s32.totalorder %s95, 0
      %s98 = sadd.s32 %s97, 1
      %s99 = scalar_select %p96, %s97, %s98
      %p102 = pneg %p96
      %p103 = scmp.eq.s32.totalorder %s17, 1
      %p104 = por %p102, %p103
      %p105 = scmp.ne.s32.totalorder %s97, %s100
      %p106 = scmp.eq.s32.totalorder %s17, 0
      %p107 = por %p105, %p106
      %p108 = scmp.ne.s32.totalorder %s97, %s100
      %p109 = scmp.eq.s32.totalorder %s22, 1
      %p110 = por %p108, %p109
      %p111 = scmp.ne.s32.totalorder %s100, %s101
      %p112 = scmp.eq.s32.totalorder %s22, 0
      %p113 = por %p111, %p112
      %p114 = scmp.ne.s32.totalorder %s100, %s101
      %p115 = scmp.eq.s32.totalorder %s23, 1
      %p116 = por %p114, %p115
      %p118 = scmp.ne.s32.totalorder %s101, %s117
      %p119 = scmp.eq.s32.totalorder %s23, 0
      %p120 = por %p118, %p119
      %p121 = scmp.le.s32.totalorder 1, %s17
      %p122 = scmp.lt.s32.totalorder %s17, 3
      %p123 = pnand %p121, %p122
      %p124 = pneg %p123
      // Predicated region
      $region9: #{tpu_custom_call.1} parent=5 // pred_check
        _
      $region10: #{tpu_custom_call.1} parent=5 // pred_check_branch
        %126 = sbr.rel (%p123) target = $region12
      $region11: #{tpu_custom_call.1} parent=5 // pred_region
        %s127 = ssub.s32 %s17, 1
      $region12: #{tpu_custom_call.1} parent=5 // pred_fallthru
        _
      %p128 = scmp.lt.s32.totalorder %s17, 2
      // Predicated region
      $region13: #{tpu_custom_call.1} parent=5 // pred_check
        %p129 = pneg %p128
      $region14: #{tpu_custom_call.1} parent=5 // pred_check_branch
        %131 = sbr.rel (%p129) target = $region16
      $region15: #{tpu_custom_call.1} parent=5 // pred_region
        // Predicated region
        $region17: #{tpu_custom_call.1} parent=15 // pred_check
          %p132 = pneg %p51
        $region18: #{tpu_custom_call.1} parent=15 // pred_check_branch
          %134 = sbr.rel (%p132) target = $region20
        $region19: #{tpu_custom_call.1} parent=15 // pred_region
          %s135 = sand.u32 %s41, 1
          %s136 = scalar_lea.sflag [#allocation3], %s135
          %s137 = sand.u32 %s41, 1
          %s138 = smul.addr %s137, 8
          %s139 = scalar_lea.vmem [#allocation2], %s138
          %s140 = smul.u32 2, %s25
          %s142 = ssub.s32 128, 128
          %143 = vsyncadd %s136, %s142
          %s144 = smul.addr %s24, 2
          %s145 = sadd.s32 %s140, %s144
          %s146 = smul.addr %s145, 64
          %s147 = scalar_lea.hbm %s0, %s146
          %s149 = sshll.u32 %s139, 4
          %s150 = int_to_ptr.vmem [resolvable:$true] %s149
          %152 = dma.hbm_to_vmem [thread:$0]  %s147, 128, %s150, %s136
        $region20: #{tpu_custom_call.1} parent=15 // pred_fallthru
          _
        // Predicated region
        $region21: #{tpu_custom_call.1} parent=15 // pred_check
          %p153 = pneg %p79
        $region22: #{tpu_custom_call.1} parent=15 // pred_check_branch
          %155 = sbr.rel (%p153) target = $region24
        $region23: #{tpu_custom_call.1} parent=15 // pred_region
          %s156 = sand.u32 %s69, 1
          %s157 = scalar_lea.sflag [#allocation6], %s156
          %s158 = sand.u32 %s69, 1
          %s159 = smul.addr %s158, 2
          %s160 = scalar_lea.vmem [#allocation5], %s159
          %s161 = smul.u32 2, %s25
          %s163 = ssub.s32 32, 32
          %164 = vsyncadd %s157, %s163
          %s165 = smul.addr %s24, 2
          %s166 = sadd.s32 %s161, %s165
          %s167 = smul.addr %s166, 16
          %s168 = scalar_lea.hbm %s1, %s167
          %s170 = sshll.u32 %s160, 4
          %s171 = int_to_ptr.vmem [resolvable:$true] %s170
          %173 = dma.hbm_to_vmem [thread:$0]  %s168, 32, %s171, %s157
        $region24: #{tpu_custom_call.1} parent=15 // pred_fallthru
          _
      $region16: #{tpu_custom_call.1} parent=5 // pred_fallthru
        _
      %p174 = scmp.le.s32.totalorder 1, %s17
      %p175 = scmp.lt.s32.totalorder %s17, 3
      %p176 = pnand %p174, %p175
      %p177 = pneg %p176
      // Predicated region
      $region25: #{tpu_custom_call.1} parent=5 // pred_check
        _
      $region26: #{tpu_custom_call.1} parent=5 // pred_check_branch
        %179 = sbr.rel (%p176) target = $region28
      $region27: #{tpu_custom_call.1} parent=5 // pred_region
        %s180 = ssub.s32 %s17, 1
        %s181 = sand.u32 %s44, 1
        %s182 = scalar_lea.sflag [#allocation3], %s181
        %s183 = sand.u32 %s44, 1
        %s184 = smul.addr %s183, 8
        %s185 = scalar_lea.vmem [#allocation2], %s184
        // Predicated region
        $region29: #{tpu_custom_call.1} parent=27 // pred_check
          %p186 = pneg %p57
        $region30: #{tpu_custom_call.1} parent=27 // pred_check_branch
          %188 = sbr.rel (%p186) target = $region32
        $region31: #{tpu_custom_call.1} parent=27 // pred_region
          %189 = dma.done %s182, 128
        $region32: #{tpu_custom_call.1} parent=27 // pred_fallthru
          _
        %s190 = sand.u32 %s72, 1
        %s191 = scalar_lea.sflag [#allocation6], %s190
        %s192 = sand.u32 %s72, 1
        %s193 = smul.addr %s192, 2
        %s194 = scalar_lea.vmem [#allocation5], %s193
        // Predicated region
        $region33: #{tpu_custom_call.1} parent=27 // pred_check
          %p195 = pneg %p85
        $region34: #{tpu_custom_call.1} parent=27 // pred_check_branch
          %197 = sbr.rel (%p195) target = $region36
        $region35: #{tpu_custom_call.1} parent=27 // pred_region
          %198 = dma.done %s191, 32
        $region36: #{tpu_custom_call.1} parent=27 // pred_fallthru
          _
        %s199 = sand.u32 %s44, 1
        %s200 = scalar_lea.sflag [#allocation3], %s199
        %s201 = sand.u32 %s44, 1
        %s202 = smul.addr %s201, 8
        %s203 = scalar_lea.vmem [#allocation2], %s202
        %p204 = pneg %p57
        %p205 = pneg %p54
        %s206 = sand.u32 %s72, 1
        %s207 = scalar_lea.sflag [#allocation6], %s206
        %s208 = sand.u32 %s72, 1
        %s209 = smul.addr %s208, 2
        %s210 = scalar_lea.vmem [#allocation5], %s209
        %p211 = pneg %p85
        %p212 = pneg %p82
        %p213 = pneg %p113
        %p214 = pneg %p110
        %s215 = sand.u32 %s100, 1
        %s216 = scalar_lea.sflag [#allocation4], %s215
        %s217 = sand.u32 %s100, 1
        %s218 = smul.addr %s217, 8
        %s219 = scalar_lea.vmem [#allocation7], %s218
        %s220 = smul.u32 2, %s27
        %s221 = smul.u32 2, %s27
        %v222 = vld [vmem:[%s185] sm:$0xff]
        %v223 = vld [vmem:[%s194] sm:$0x3]
        %v225 = vcombine.high %v222, %v222
        %vm227 = vcmask 1043456
        %v228 = vsel %vm227, %v222, -inf
        %v229 = vrot.slane %v228, 4
        %v230 = vmax.f32 %v228, %v229
        %v231 = vrot.slane %v230, 2
        %v232 = vmax.f32 %v230, %v231
        %v233 = vrot.slane %v232, 1
        %v234 = vmax.f32 %v232, %v233
        %v235 = vsel %vm227, %v225, -inf
        %v236 = vrot.slane %v235, 4
        %v237 = vmax.f32 %v235, %v236
        %v238 = vrot.slane %v237, 2
        %v239 = vmax.f32 %v237, %v238
        %v240 = vrot.slane %v239, 1
        %v241 = vmax.f32 %v239, %v240
        %v244 = vcombine.low %v234, %v241
        %v246 = vsub.f32 %v222, %v244
        %v247 = vmul.f32 %v246, 1.442695
        %v248 = vpow.pop %v247
        %v250 = vcombine.high %v248, %v248
        %v252 = vsel %vm227, %v248, 0.0
        %v253 = vrot.slane %v252, 4
        %v254 = vadd.f32 %v252, %v253
        %v255 = vrot.slane %v254, 2
        %v256 = vadd.f32 %v254, %v255
        %v257 = vrot.slane %v256, 1
        %v258 = vadd.f32 %v256, %v257
        %v259 = vsel %vm227, %v250, 0.0
        %v260 = vrot.slane %v259, 4
        %v261 = vadd.f32 %v259, %v260
        %v262 = vrot.slane %v261, 2
        %v263 = vadd.f32 %v261, %v262
        %v264 = vrot.slane %v263, 1
        %v265 = vadd.f32 %v263, %v264
        %v266 = vlog2.pop %v258
        %v267 = vmul.f32 %v266, 0.6931472
        %v268 = vlog2.pop %v265
        %v269 = vmul.f32 %v268, 0.6931472
        %v270 = vlaneseq
        %v271 = vshrl.u32 %v270, 7
        %v272 = vlaneseq
        %v273 = vshrl.u32 %v272, 7
        %v274 = vsub.s32 0, %v273
        %v275 = vrot.slane %v223, %v274
        %v276 = vlaneseq
        %v277 = vshrl.u32 %v276, 7
        %v278 = vsub.s32 1, %v277
        %v279 = vrot.slane %v223, %v278
        %vm280 = vcmp.eq.s32.totalorder %v271, %v275
        %vm281 = vcmp.eq.s32.totalorder %v271, %v279
        %v283 = vcombine.high %v246, %v246
        %v285 = vsel %vm280, %v246, 0.0
        %v286 = vsel %vm281, %v283, 0.0
        %v287 = vsel %vm227, %v285, 0.0
        %v288 = vrot.slane %v287, 4
        %v289 = vadd.f32 %v287, %v288
        %v290 = vrot.slane %v289, 2
        %v291 = vadd.f32 %v289, %v290
        %v292 = vrot.slane %v291, 1
        %v293 = vadd.f32 %v291, %v292
        %v294 = vsel %vm227, %v286, 0.0
        %v295 = vrot.slane %v294, 4
        %v296 = vadd.f32 %v294, %v295
        %v297 = vrot.slane %v296, 2
        %v298 = vadd.f32 %v296, %v297
        %v299 = vrot.slane %v298, 1
        %v300 = vadd.f32 %v298, %v299
        %vm301 = vcmp.ge.s32.totalorder %v223, 0
        %vm302 = vcmp.lt.s32.totalorder %v223, 4
        %vm303 = vmand %vm301, %vm302
        %v304 = vsub.f32 %v267, %v293
        %v305 = vsub.f32 %v269, %v300
        %v308 = vcombine.low %v304, %v305
        %v310 = vunpack.c.l.s4 1966171168
        %v311 = vunpack.c.0.s8 %v310
        %v312 = vlaneseq
        %v313 = vshrl.u32 %v312, 7
        %v314 = vsub.s32 %v311, %v313
        %v315 = vrot.slane %v308, %v314
        %v317 = vunpack.c.l.s4 1966171168
        %v318 = vunpack.c.0.s8 %v317
        %v319 = vlaneseq
        %v320 = vshrl.u32 %v319, 7
        %v321 = vsub.s32 %v318, %v320
        %v322 = vrot.slane %v315, %v321
        %v324 = vsel %vm303, %v322, 0.0
        %v326 = vlaneseq
        %v327 = vshrl.u32 %v326, 7
        %v328 = vsub.s32 0, %v327
        %v329 = vrot.slane %v324, %v328
        %v330 = vlaneseq
        %v331 = vshrl.u32 %v330, 7
        %v332 = vsub.s32 1, %v331
        %v333 = vrot.slane %v324, %v332
        %vm336 = vcmask 1040384
        %v337 = vsel %vm336, %v329, 0.0
        %v338 = vsel %vm336, %v333, 0.0
        %v339 = vadd.f32 %v337, %v338
        %340 = vadd.xlane.f32.xlu0 %v339
        %v341 = vpop.xlane.xlu0 %340
        %v342 = vrot.slane %v341, 4
        %v343 = vadd.f32 %v341, %v342
        %v344 = vrot.slane %v343, 2
        %v345 = vadd.f32 %v343, %v344
        %v346 = vrot.slane %v345, 1
        %v347 = vadd.f32 %v345, %v346
        %s348 = vtos %v347
        %v349 = vsel %vm303, 1, 0
        %v350 = vcvt.s32.f32 %v349
        %v352 = vlaneseq
        %v353 = vshrl.u32 %v352, 7
        %v354 = vsub.s32 0, %v353
        %v355 = vrot.slane %v350, %v354
        %v356 = vlaneseq
        %v357 = vshrl.u32 %v356, 7
        %v358 = vsub.s32 1, %v357
        %v359 = vrot.slane %v350, %v358
        %v362 = vsel %vm336, %v355, 0.0
        %v363 = vsel %vm336, %v359, 0.0
        %v364 = vadd.f32 %v362, %v363
        %365 = vadd.xlane.f32.xlu0 %v364
        %v366 = vpop.xlane.xlu0 %365
        %v367 = vrot.slane %v366, 4
        %v368 = vadd.f32 %v366, %v367
        %v369 = vrot.slane %v368, 2
        %v370 = vadd.f32 %v368, %v369
        %v371 = vrot.slane %v370, 1
        %v372 = vadd.f32 %v370, %v371
        %s373 = vtos %v372
        %vm374 = vcmp.eq.s32.totalorder %v271, 0
        %vm375 = vcmp.eq.s32.totalorder %v271, 1
        %v376 = vstv %s373
        %v377 = vsel %vm375, %v376, 0.0
        %v378 = vstv %s348
        %v379 = vsel %vm374, %v378, %v377
        %380 = vst [vmem:[%s219] sm:$0xff] %v379
        %s381 = sand.u32 %s100, 1
        %s382 = scalar_lea.sflag [#allocation4], %s381
        %s383 = sand.u32 %s100, 1
        %s384 = smul.addr %s383, 8
        %s385 = scalar_lea.vmem [#allocation7], %s384
        // Predicated region
        $region37: #{tpu_custom_call.1} parent=27 // pred_check
          %p386 = pneg %p110
        $region38: #{tpu_custom_call.1} parent=27 // pred_check_branch
          %388 = sbr.rel (%p386) target = $region40
        $region39: #{tpu_custom_call.1} parent=27 // pred_region
          %s390 = ssub.s32 128, 128
          %391 = vsyncadd %s382, %s390
          %s392 = sadd.s32 %s27, %s26
          %s393 = smul.addr %s392, 128
          %s394 = scalar_lea.hbm %s2, %s393
          %s396 = sshll.u32 %s385, 4
          %s397 = int_to_ptr.vmem [resolvable:$true] %s396
          %399 = dma.vmem_to_hbm [thread:$0]  %s397, 128, %s394, %s382
        $region40: #{tpu_custom_call.1} parent=27 // pred_fallthru
          _
      $region28: #{tpu_custom_call.1} parent=5 // pred_fallthru
        _
      %p400 = scmp.le.s32.totalorder 2, %s17
      // Predicated region
      $region41: #{tpu_custom_call.1} parent=5 // pred_check
        %p401 = pneg %p400
      $region42: #{tpu_custom_call.1} parent=5 // pred_check_branch
        %403 = sbr.rel (%p401) target = $region44
      $region43: #{tpu_custom_call.1} parent=5 // pred_region
        %s404 = ssub.s32 %s17, 2
        // Predicated region
        $region45: #{tpu_custom_call.1} parent=43 // pred_check
          %p405 = pneg %p116
        $region46: #{tpu_custom_call.1} parent=43 // pred_check_branch
          %407 = sbr.rel (%p405) target = $region48
        $region47: #{tpu_custom_call.1} parent=43 // pred_region
          %s408 = sand.u32 %s101, 1
          %s409 = scalar_lea.sflag [#allocation4], %s408
          %s410 = sand.u32 %s101, 1
          %s411 = smul.addr %s410, 8
          %s412 = scalar_lea.vmem [#allocation7], %s411
          %413 = dma.done %s409, 128
        $region48: #{tpu_custom_call.1} parent=43 // pred_fallthru
          _
      $region44: #{tpu_custom_call.1} parent=5 // pred_fallthru
        _
    $region6: #{tpu_custom_call.1} parent=1 // loop_footer
      %s21 = sadd.s32 1, %s17
    $region7: #{tpu_custom_call.1} parent=1 // loop_footer_branch
      %16 = sbr.rel target = $region3
    $region8: #{tpu_custom_call.1} parent=1 // loop_exit
      _
    %414 = vsyncpa [#allocation3], 1
    %s415 = scalar_lea.sflag [#allocation3], 1
    %416 = vsyncpa %s415, 1
    %417 = vsyncpa [#allocation6], 1
    %s418 = scalar_lea.sflag [#allocation6], 1
    %419 = vsyncpa %s418, 1
    %420 = vsyncpa [#allocation4], 1
    %s421 = scalar_lea.sflag [#allocation4], 1
    %422 = vsyncpa %s421, 1

</llo_original>
